<compile_context>
chip_gen: v7x
topology: tpu7x:2x2x1
jax: 0.10.0
libtpu: 0.0.40
codegen_flags: <defaults>
</compile_context>

<pallas_src>
import jax
import jax.numpy as jnp
from jax.experimental import pallas as pl
from jax.experimental.pallas import tpu as pltpu


def _round_up(n, m):
    return ((n + m - 1) // m) * m


def _cdiv(a, b):
    return (a + b - 1) // b


# ---------------------------------------------------------------------------
# Kernel: probs = softmax(relu(x @ W1 + b1) @ W2 + b2, axis=1)
# ---------------------------------------------------------------------------
def policy_kernel(x_ref, w1_ref, b1_ref, w2_ref, b2_ref, out_ref):
    # Layer 1 on the MXU (tiny K pads inside the MXU; keeps VALU free for the
    # softmax epilogue).  f32 operands, f32 accumulate.
    x = x_ref[...]                                        # (TB, obs_dim)
    h = jnp.dot(x, w1_ref[...], preferred_element_type=jnp.float32) + b1_ref[...]
    h = jnp.maximum(h, 0.0)

    # Layer 2 on the MXU with bf16 operands (w2 stored bf16 at prep time),
    # f32 accumulation; bias add (incl. the -1e30 padded columns) stays f32.
    logits = jnp.dot(h.astype(w2_ref.dtype), w2_ref[...],
                     preferred_element_type=jnp.float32) + b2_ref[...]

    # Softmax over the (padded) action lanes.  Padded columns carry a -1e30
    # bias so exp() is exactly 0 and they never affect the max or the sum.
    # Exact divide -> rows sum to 1 (kernel is nowhere near EUP/VALU bound).
    m = jnp.max(logits, axis=1, keepdims=True)
    e = jnp.exp(logits - m)
    denom = jnp.sum(e, axis=1, keepdims=True)
    out_ref[...] = (e / denom).astype(out_ref.dtype)


# ---------------------------------------------------------------------------
# One-time parameter preparation (hoisted out of the per-call path).
# ---------------------------------------------------------------------------
def prepare_policy_params(w1, b1, w2, b2):
    """Pad / cast parameters once; returns a dict consumed by the forward."""
    obs_dim, hidden = w1.shape
    action_dim = w2.shape[1]
    A_pad = _round_up(max(action_dim, 128), 128)          # lane-dense output slab

    b1 = jnp.asarray(b1, jnp.float32).reshape(1, hidden)
    b2 = jnp.asarray(b2, jnp.float32).reshape(1, action_dim)

    # Padded action columns: zero weights + very negative bias => exp() == 0.
    w2_p = jnp.pad(jnp.asarray(w2, jnp.float32), ((0, 0), (0, A_pad - action_dim)))
    b2_p = jnp.pad(b2, ((0, 0), (0, A_pad - action_dim)), constant_values=-1e30)

    return dict(
        w1=jnp.asarray(w1, jnp.float32),
        b1=b1,
        w2=w2_p.astype(jnp.bfloat16),   # bf16 MXU operands for layer 2
        b2=b2_p,                        # bias (incl. -1e30 pad) stays f32
        obs_dim=obs_dim,
        hidden=hidden,
        action_dim=action_dim,
        A_pad=A_pad,
    )


def _choose_tiles(B, block_b):
    """Sublane-aligned batch tile; >=2 tiles when possible (v7x megacore)."""
    B_ru8 = _round_up(max(B, 1), 8)
    if B_ru8 <= block_b:
        if B_ru8 >= 16:
            TB = max(8, _round_up(_cdiv(B_ru8, 2), 8))    # grid length >= 2
        else:
            TB = B_ru8                                    # batch too small to split
    else:
        TB = block_b
    B_pad = _round_up(B_ru8, TB)
    return TB, B_pad


# ---------------------------------------------------------------------------
# Forward wrapper.
# ---------------------------------------------------------------------------
def policy_network_forward(x, params, *, block_b=2048, return_padded=False):
    """probs = softmax(relu(x @ w1 + b1) @ w2 + b2, axis=1) via one Pallas kernel.

    If return_padded=True the full (B_pad, A_pad) f32 slab is returned (padded
    action columns are exact zeros, rows >= B are padding) which avoids the
    slice round trip for consumers that can index it directly.
    """
    B, obs_dim = x.shape
    hidden = params["hidden"]
    A_pad = params["A_pad"]
    action_dim = params["action_dim"]

    TB, B_pad = _choose_tiles(B, block_b)
    x_p = x if B_pad == B else jnp.pad(x, ((0, B_pad - B), (0, 0)))

    out = pl.pallas_call(
        policy_kernel,
        out_shape=jax.ShapeDtypeStruct((B_pad, A_pad), jnp.float32),
        grid=(B_pad // TB,),
        in_specs=[
            pl.BlockSpec((TB, obs_dim), lambda i: (i, 0)),       # x: tiled over batch
            pl.BlockSpec((obs_dim, hidden), lambda i: (0, 0)),   # w1: resident
            pl.BlockSpec((1, hidden), lambda i: (0, 0)),         # b1: resident
            pl.BlockSpec((hidden, A_pad), lambda i: (0, 0)),     # w2 (bf16): resident
            pl.BlockSpec((1, A_pad), lambda i: (0, 0)),          # b2: resident
        ],
        out_specs=pl.BlockSpec((TB, A_pad), lambda i: (i, 0)),   # lane-dense store
        compiler_params=pltpu.CompilerParams(
            dimension_semantics=("parallel",),   # batch tiles shard across TCs (v7x)
        ),
    )(x_p, params["w1"], params["b1"], params["w2"], params["b2"])

    if return_padded:
        return out
    return out[:B, :action_dim]


def init_params(key, obs_dim, action_dim, hidden=128):
    """Deterministic init mimicking PyTorch's default Linear init (uniform ±1/sqrt(fan_in))."""
    k1, k2, k3, k4 = jax.random.split(key, 4)
    bound1 = 1.0 / jnp.sqrt(obs_dim)
    bound2 = 1.0 / jnp.sqrt(hidden)
    # Stored as (in, out) so the kernel can use x @ W directly.
    w1 = jax.random.uniform(k1, (obs_dim, hidden), jnp.float32, -bound1, bound1)
    b1 = jax.random.uniform(k2, (hidden,), jnp.float32, -bound1, bound1)
    w2 = jax.random.uniform(k3, (hidden, action_dim), jnp.float32, -bound2, bound2)
    b2 = jax.random.uniform(k4, (action_dim,), jnp.float32, -bound2, bound2)
    return w1, b1, w2, b2


if __name__ == "__main__":
    key = jax.random.PRNGKey(0)
    kx, kp = jax.random.split(key)

    batch = 2
    obs_dim = 4       # observation_space
    action_dim = 6    # action_space
    hidden = 128

    x = jax.random.normal(kx, (batch, obs_dim), jnp.float32)
    w1, b1, w2, b2 = init_params(kp, obs_dim, action_dim, hidden)

    params = prepare_policy_params(w1, b1, w2, b2)   # one-time prep (padding, bf16 cast)
    probs = policy_network_forward(x, params)
    probs = jax.block_until_ready(probs)

    # Reference check in plain JAX (same math as the PyTorch forward, f32).
    h_ref = jnp.maximum(x @ w1 + b1[None, :], 0.0)
    logits_ref = h_ref @ w2 + b2[None, :]
    probs_ref = jax.nn.softmax(logits_ref, axis=1)

    assert probs.shape == (batch, action_dim)
    # Tolerance covers the bf16 layer-2 MXU operands (f32 accumulation).
    assert jnp.allclose(probs, probs_ref, atol=3e-3, rtol=3e-3), "mismatch vs reference"
    # Exact divide in the softmax epilogue -> rows sum to 1 to f32 precision.
    assert jnp.allclose(jnp.sum(probs, axis=1), 1.0, atol=1e-4), "rows must sum to 1"

    print("KERNEL_OK")
</pallas_src>

<mosaic_0001>
module attributes {stable_mosaic.version = 11 : i64} {
  func.func @policy_kernel(%arg0: i32, %arg1: memref<8x4xf32, #tpu.memory_space<vmem>>, %arg2: memref<4x128xf32, #tpu.memory_space<vmem>>, %arg3: memref<1x128xf32, #tpu.memory_space<vmem>>, %arg4: memref<128x128xbf16, #tpu.memory_space<vmem>>, %arg5: memref<1x128xf32, #tpu.memory_space<vmem>>, %arg6: memref<8x128xf32, #tpu.memory_space<vmem>>) attributes {dimension_semantics = [#tpu.dimension_semantics<parallel>], iteration_bounds = array<i64: 1>, scalar_prefetch = 0 : i64, scratch_operands = 0 : i64, tpu.core_type = #tpu.core_type<tc>, window_params = [{transform_indices = @transform_0, window_bounds = array<i64: 8, 4>}, {pipeline_mode = #tpu.pipeline_mode<synchronous>, transform_indices = @transform_1, window_bounds = array<i64: 4, 128>}, {pipeline_mode = #tpu.pipeline_mode<synchronous>, transform_indices = @transform_2, window_bounds = array<i64: 1, 128>}, {pipeline_mode = #tpu.pipeline_mode<synchronous>, transform_indices = @transform_3, window_bounds = array<i64: 128, 128>}, {pipeline_mode = #tpu.pipeline_mode<synchronous>, transform_indices = @transform_4, window_bounds = array<i64: 1, 128>}, {transform_indices = @transform_5, window_bounds = array<i64: 8, 128>}]} {
    %c0 = arith.constant 0 : index
    %c0_0 = arith.constant 0 : index
    %0 = vector.load %arg1[%c0, %c0_0] : memref<8x4xf32, #tpu.memory_space<vmem>>, vector<8x4xf32>
    %c0_1 = arith.constant 0 : index
    %c0_2 = arith.constant 0 : index
    %1 = vector.load %arg2[%c0_1, %c0_2] : memref<4x128xf32, #tpu.memory_space<vmem>>, vector<4x128xf32>
    %cst = arith.constant dense<0.000000e+00> : vector<8x128xf32>
    %2 = tpu.matmul %0, %1, %cst {dimension_numbers = #tpu.dot_dimension_numbers<[1], [0], [0], [1], [0, 0, 1, 1], [], []>} : vector<8x4xf32>, vector<4x128xf32>, vector<8x128xf32> -> vector<8x128xf32>
    %c0_3 = arith.constant 0 : index
    %c0_4 = arith.constant 0 : index
    %3 = vector.load %arg3[%c0_3, %c0_4] : memref<1x128xf32, #tpu.memory_space<vmem>>, vector<1x128xf32>
    %4 = vector.broadcast %3 : vector<1x128xf32> to vector<8x128xf32>
    %5 = arith.addf %2, %4 : vector<8x128xf32>
    %cst_5 = arith.constant 0.000000e+00 : f32
    %6 = vector.broadcast %cst_5 : f32 to vector<8x128xf32>
    %7 = arith.maximumf %5, %6 : vector<8x128xf32>
    %8 = arith.truncf %7 : vector<8x128xf32> to vector<8x128xbf16>
    %c0_6 = arith.constant 0 : index
    %c0_7 = arith.constant 0 : index
    %9 = vector.load %arg4[%c0_6, %c0_7] : memref<128x128xbf16, #tpu.memory_space<vmem>>, vector<128x128xbf16>
    %cst_8 = arith.constant dense<0.000000e+00> : vector<8x128xf32>
    %10 = tpu.matmul %8, %9, %cst_8 {dimension_numbers = #tpu.dot_dimension_numbers<[1], [0], [0], [1], [0, 0, 1, 1], [], []>} : vector<8x128xbf16>, vector<128x128xbf16>, vector<8x128xf32> -> vector<8x128xf32>
    %c0_9 = arith.constant 0 : index
    %c0_10 = arith.constant 0 : index
    %11 = vector.load %arg5[%c0_9, %c0_10] : memref<1x128xf32, #tpu.memory_space<vmem>>, vector<1x128xf32>
    %12 = vector.broadcast %11 : vector<1x128xf32> to vector<8x128xf32>
    %13 = arith.addf %10, %12 : vector<8x128xf32>
    %cst_11 = arith.constant dense<0xFF800000> : vector<8xf32>
    %14 = vector.multi_reduction <maximumf>, %13, %cst_11 [1] : vector<8x128xf32> to vector<8xf32>
    %15 = vector.shape_cast %14 : vector<8xf32> to vector<8x1xf32>
    %16 = vector.broadcast %15 : vector<8x1xf32> to vector<8x128xf32>
    %17 = arith.subf %13, %16 : vector<8x128xf32>
    %18 = math.exp %17 : vector<8x128xf32>
    %cst_12 = arith.constant dense<0.000000e+00> : vector<8xf32>
    %19 = vector.multi_reduction <add>, %18, %cst_12 [1] : vector<8x128xf32> to vector<8xf32>
    %20 = vector.shape_cast %19 : vector<8xf32> to vector<8x1xf32>
    %21 = vector.broadcast %20 : vector<8x1xf32> to vector<8x128xf32>
    %22 = arith.divf %18, %21 : vector<8x128xf32>
    %c0_13 = arith.constant 0 : index
    %c0_14 = arith.constant 0 : index
    %23 = vector.load %arg6[%c0_13, %c0_14] : memref<8x128xf32, #tpu.memory_space<vmem>>, vector<8x128xf32>
    tpu.vector_store %arg6[%c0_13, %c0_14], %22 {strides = array<i32>} : memref<8x128xf32, #tpu.memory_space<vmem>>, vector<8x128xf32>,
    return
  }
  func.func @transform_0(%arg0: i32) -> (i32, i32) {
    %c0_i32 = arith.constant 0 : i32
    %c0_i32_0 = arith.constant 0 : i32
    return %arg0, %c0_i32 : i32, i32
  }
  func.func @transform_1(%arg0: i32) -> (i32, i32) {
    %c0_i32 = arith.constant 0 : i32
    %c0_i32_0 = arith.constant 0 : i32
    %c0_i32_1 = arith.constant 0 : i32
    return %c0_i32, %c0_i32_0 : i32, i32
  }
  func.func @transform_2(%arg0: i32) -> (i32, i32) {
    %c0_i32 = arith.constant 0 : i32
    %c0_i32_0 = arith.constant 0 : i32
    %c0_i32_1 = arith.constant 0 : i32
    return %c0_i32, %c0_i32_0 : i32, i32
  }
  func.func @transform_3(%arg0: i32) -> (i32, i32) {
    %c0_i32 = arith.constant 0 : i32
    %c0_i32_0 = arith.constant 0 : i32
    %c0_i32_1 = arith.constant 0 : i32
    return %c0_i32, %c0_i32_0 : i32, i32
  }
  func.func @transform_4(%arg0: i32) -> (i32, i32) {
    %c0_i32 = arith.constant 0 : i32
    %c0_i32_0 = arith.constant 0 : i32
    %c0_i32_1 = arith.constant 0 : i32
    return %c0_i32, %c0_i32_0 : i32, i32
  }
  func.func @transform_5(%arg0: i32) -> (i32, i32) {
    %c0_i32 = arith.constant 0 : i32
    %c0_i32_0 = arith.constant 0 : i32
    return %arg0, %c0_i32 : i32, i32
  }
}

</mosaic_0001>

<llo_original>
// kernel: tpu_custom_call.1
$region0: #{tpu_custom_call.1}
  #allocation0 [shape = 'u32[]', space=smem, size = 0x4, offset = 0x4, fixed_abs, tag = 'smem constant byte address 0x4 - core index']
  #allocation1 [shape = 'u32[144,128]{1,0:T(1,128)}', space=vmem, size = 0x12000, scoped, tag = 'internal scratch']
  %s0 = inlined_call_operand.vmem [shape: f32[8,4], index: 0, kind: input, shape index: {}]
  %s1 = inlined_call_operand.vmem [shape: f32[4,128], index: 1, kind: input, shape index: {}]
  %s2 = inlined_call_operand.vmem [shape: f32[1,128], index: 2, kind: input, shape index: {}]
  %s3 = inlined_call_operand.hbm [shape: bf16[128,128], index: 3, kind: input, shape index: {}]
  %s4 = inlined_call_operand.vmem [shape: f32[1,128], index: 4, kind: input, shape index: {}]
  %s5 = inlined_call_operand.hbm [shape: f32[8,128], index: 5, kind: output, shape index: {}]
  %s6 = sld [smem:[#allocation0]]
  $region34: #{tpu_custom_call.1} parent=0
    _
  %s8 = ssub.s32 1, %s6
  %s9 = scalar_select 0, %s8, %s6
  $region1: #{tpu_custom_call.1} parent=0
    #allocation2 [shape = 'u8[32768]{0}', space=vmem, size = 0x8000, scoped, tag = 'input window, operand 3, single buffered']
    #allocation3 [shape = 's32[1]{0}', space=sflag, size = 0x4, scoped, tag = 'scoped memory for tpu_custom_call.1']
    #allocation4 [shape = 's32[1]{0}', space=sflag, size = 0x4, scoped, tag = 'scoped memory for tpu_custom_call.1']
    #allocation5 [shape = 'u8[4096]{0}', space=vmem, size = 0x1000, scoped, tag = 'output window, operand 0, single buffered']
    %10 = vsyncpa [#allocation3], 0
    %11 = vsyncpa [#allocation4], 0
    // Predicated region
    $region2: #{tpu_custom_call.1} parent=1 // pred_check
      _
    $region3: #{tpu_custom_call.1} parent=1 // pred_check_branch
      %13 = sbr.rel (0) target = $region5
    $region4: #{tpu_custom_call.1} parent=1 // pred_region
      _
    $region5: #{tpu_custom_call.1} parent=1 // pred_fallthru
      _
    // Predicated region
    $region6: #{tpu_custom_call.1} parent=1 // pred_check
      _
    $region7: #{tpu_custom_call.1} parent=1 // pred_check_branch
      %15 = sbr.rel (0) target = $region9
    $region8: #{tpu_custom_call.1} parent=1 // pred_region
      _
    $region9: #{tpu_custom_call.1} parent=1 // pred_fallthru
      _
    // Predicated region
    $region10: #{tpu_custom_call.1} parent=1 // pred_check
      _
    $region11: #{tpu_custom_call.1} parent=1 // pred_check_branch
      %17 = sbr.rel (0) target = $region13
    $region12: #{tpu_custom_call.1} parent=1 // pred_region
      _
    $region13: #{tpu_custom_call.1} parent=1 // pred_fallthru
      _
    // Predicated region
    $region14: #{tpu_custom_call.1} parent=1 // pred_check
      _
    $region15: #{tpu_custom_call.1} parent=1 // pred_check_branch
      %19 = sbr.rel (0) target = $region17
    $region16: #{tpu_custom_call.1} parent=1 // pred_region
      %s21 = ssub.s32 1024, 1024
      %22 = vsyncadd [#allocation3], %s21
      %s23 = sshll.u32 [#allocation2], 4
      %s24 = int_to_ptr.vmem [resolvable:$true] %s23
      %29 = dma.hbm_to_vmem [thread:$0]  %s3, 1024, %s24, [#allocation3], 64, 64, 4
    $region17: #{tpu_custom_call.1} parent=1 // pred_fallthru
      _
    // Predicated region
    $region18: #{tpu_custom_call.1} parent=1 // pred_check
      _
    $region19: #{tpu_custom_call.1} parent=1 // pred_check_branch
      %31 = sbr.rel (0) target = $region21
    $region20: #{tpu_custom_call.1} parent=1 // pred_region
      _
    $region21: #{tpu_custom_call.1} parent=1 // pred_fallthru
      _
    // Predicated region
    $region22: #{tpu_custom_call.1} parent=1 // pred_check
      _
    $region23: #{tpu_custom_call.1} parent=1 // pred_check_branch
      %33 = sbr.rel (0) target = $region25
    $region24: #{tpu_custom_call.1} parent=1 // pred_region
      %34 = dma.done [#allocation3], 1024
    $region25: #{tpu_custom_call.1} parent=1 // pred_fallthru
      _
    %v36 = vld [vmem:[%s0] sm:$0xff]
    %v37 = vld [vmem:[%s1] sm:$0xf]
    %v38 = vld [vmem:[%s2] sm:$0x1]
    %v40 = vlaneseq
    %v41 = vshrl.u32 %v40, 7
    %v42 = vsub.s32 0, %v41
    %v43 = vrot.slane %v38, %v42
    %vm45 = vcmask 31744
    %v47 = vsel %vm45, %v36, 0
    %vm49 = vcmask 1043456
    %v51 = vsel %vm49, %v37, 0
    %53 = vmatprep.subr.mxu0 0.0
    %54 = vmatpush1.msra.mxu0 %v51
    %55 = vmatprep.subr.mxu0 0.0
    %56 = vmatpush1.msra.mxu0 0.0
    %57 = vmatprep.subr.mxu0 0.0
    %58 = vmatpush1.msra.mxu0 0.0
    %59 = vmatprep.subr.mxu0 0.0
    %60 = vmatpush1.msra.mxu0 0.0
    %61 = vmatprep.subr.mxu0 0.0
    %62 = vmatpush1.msra.mxu0 0.0
    %63 = vmatprep.subr.mxu0 0.0
    %64 = vmatpush1.msra.mxu0 0.0
    %65 = vmatprep.subr.mxu0 0.0
    %66 = vmatpush1.msra.mxu0 0.0
    %67 = vmatprep.subr.mxu0 0.0
    %68 = vmatpush1.msra.mxu0 0.0
    %69 = vmatprep.subr.mxu0 0.0
    %70 = vmatpush1.msra.mxu0 0.0
    %71 = vmatprep.subr.mxu0 0.0
    %72 = vmatpush1.msra.mxu0 0.0
    %73 = vmatprep.subr.mxu0 0.0
    %74 = vmatpush1.msra.mxu0 0.0
    %75 = vmatprep.subr.mxu0 0.0
    %76 = vmatpush1.msra.mxu0 0.0
    %77 = vmatprep.subr.mxu0 0.0
    %78 = vmatpush1.msra.mxu0 0.0
    %79 = vmatprep.subr.mxu0 0.0
    %80 = vmatpush1.msra.mxu0 0.0
    %81 = vmatprep.subr.mxu0 0.0
    %82 = vmatpush1.msra.mxu0 0.0
    %83 = vmatprep.subr.mxu0 0.0
    %84 = vmatpush1.msra.mxu0 0.0
    %85 = vmatprep.subr.mxu0 0.0
    %86 = vmatpush1.msra.mxu0 0.0
    %87 = vmatprep.subr.mxu0 0.0
    %88 = vmatpush1.msra.mxu0 0.0
    %89 = vmatprep.subr.mxu0 0.0
    %90 = vmatpush1.msra.mxu0 0.0
    %91 = vmatprep.subr.mxu0 0.0
    %92 = vmatpush1.msra.mxu0 0.0
    %93 = vmatprep.subr.mxu0 0.0
    %94 = vmatpush1.msra.mxu0 0.0
    %95 = vmatprep.subr.mxu0 0.0
    %96 = vmatpush1.msra.mxu0 0.0
    %97 = vmatprep.subr.mxu0 0.0
    %98 = vmatpush1.msra.mxu0 0.0
    %99 = vmatprep.subr.mxu0 0.0
    %100 = vmatpush1.msra.mxu0 0.0
    %101 = vmatprep.subr.mxu0 0.0
    %102 = vmatpush1.msra.mxu0 0.0
    %103 = vmatprep.subr.mxu0 0.0
    %104 = vmatpush1.msra.mxu0 0.0
    %105 = vmatprep.subr.mxu0 0.0
    %106 = vmatpush1.msra.mxu0 0.0
    %107 = vmatprep.subr.mxu0 0.0
    %108 = vmatpush1.msra.mxu0 0.0
    %109 = vmatprep.subr.mxu0 0.0
    %110 = vmatpush1.msra.mxu0 0.0
    %111 = vmatprep.subr.mxu0 0.0
    %112 = vmatpush1.msra.mxu0 0.0
    %113 = vmatprep.subr.mxu0 0.0
    %114 = vmatpush1.msra.mxu0 0.0
    %115 = vmatprep.subr.mxu0 0.0
    %116 = vmatpush1.msra.mxu0 0.0
    %117 = vmatprep.mubr.f32.mxu0 0.0
    %118 = vmatmul.mubr.f32.gmra.mrb[0].mxu0 %v47
    %v119 = vpop.f32.mrb[0].mxu0
    %v120 = vadd.f32 %v43, %v119
    %v121 = vpop.f32.mrb[0].mxu0
    %122 = vdwg.mxu0
    %v123 = vmax.f32 %v120, 0.0
    %v124 = vpack.c.bf16 %v123, %v123
    %v125 = vld [vmem:[#allocation2] sm:$0xf]
    %v126 = vld [vmem:[#allocation2 + $0x4] sm:$0xf]
    %v127 = vld [vmem:[#allocation2 + $0x8] sm:$0xf]
    %v128 = vld [vmem:[#allocation2 + $0xc] sm:$0xf]
    %v129 = vld [vmem:[#allocation2 + $0x10] sm:$0xf]
    %v130 = vld [vmem:[#allocation2 + $0x14] sm:$0xf]
    %v131 = vld [vmem:[#allocation2 + $0x18] sm:$0xf]
    %v132 = vld [vmem:[#allocation2 + $0x1c] sm:$0xf]
    %v133 = vld [vmem:[#allocation2 + $0x20] sm:$0xf]
    %v134 = vld [vmem:[#allocation2 + $0x24] sm:$0xf]
    %v135 = vld [vmem:[#allocation2 + $0x28] sm:$0xf]
    %v136 = vld [vmem:[#allocation2 + $0x2c] sm:$0xf]
    %v137 = vld [vmem:[#allocation2 + $0x30] sm:$0xf]
    %v138 = vld [vmem:[#allocation2 + $0x34] sm:$0xf]
    %v139 = vld [vmem:[#allocation2 + $0x38] sm:$0xf]
    %v140 = vld [vmem:[#allocation2 + $0x3c] sm:$0xf]
    %v141 = vld [vmem:[%s4] sm:$0x1]
    %v143 = vlaneseq
    %v144 = vshrl.u32 %v143, 7
    %v145 = vsub.s32 0, %v144
    %v146 = vrot.slane %v141, %v145
    %v164 = vunpack.c.l.b16 %v125
    %v165 = vunpack.c.l.b16 %v126
    %v166 = vunpack.c.l.b16 %v127
    %v167 = vunpack.c.l.b16 %v128
    %v168 = vunpack.c.l.b16 %v129
    %v169 = vunpack.c.l.b16 %v130
    %v170 = vunpack.c.l.b16 %v131
    %v171 = vunpack.c.l.b16 %v132
    %v172 = vunpack.c.l.b16 %v133
    %v173 = vunpack.c.l.b16 %v134
    %v174 = vunpack.c.l.b16 %v135
    %v175 = vunpack.c.l.b16 %v136
    %v176 = vunpack.c.l.b16 %v137
    %v177 = vunpack.c.l.b16 %v138
    %v178 = vunpack.c.l.b16 %v139
    %v179 = vunpack.c.l.b16 %v140
    %v180 = vpack.c.b16 %v165, %v164
    %v181 = vpack.c.b16 %v167, %v166
    %v182 = vpack.c.b16 %v169, %v168
    %v183 = vpack.c.b16 %v171, %v170
    %v184 = vpack.c.b16 %v173, %v172
    %v185 = vpack.c.b16 %v175, %v174
    %v186 = vpack.c.b16 %v177, %v176
    %v187 = vpack.c.b16 %v179, %v178
    %196 = vmatprep.subr.bf16.mxu0 0
    %197 = vmatpush1.bf16.msra.mxu0 %v180
    %198 = vmatprep.subr.bf16.mxu0 0
    %199 = vmatpush1.bf16.msra.mxu0 %v181
    %200 = vmatprep.subr.bf16.mxu0 0
    %201 = vmatpush1.bf16.msra.mxu0 %v182
    %202 = vmatprep.subr.bf16.mxu0 0
    %203 = vmatpush1.bf16.msra.mxu0 %v183
    %204 = vmatprep.subr.bf16.mxu0 0
    %205 = vmatpush1.bf16.msra.mxu0 %v184
    %206 = vmatprep.subr.bf16.mxu0 0
    %207 = vmatpush1.bf16.msra.mxu0 %v185
    %208 = vmatprep.subr.bf16.mxu0 0
    %209 = vmatpush1.bf16.msra.mxu0 %v186
    %210 = vmatprep.subr.bf16.mxu0 0
    %211 = vmatpush1.bf16.msra.mxu0 %v187
    %212 = vmatprep.subr.bf16.mxu0 0
    %213 = vmatpush1.bf16.msra.mxu0 0
    %214 = vmatprep.subr.bf16.mxu0 0
    %215 = vmatpush1.bf16.msra.mxu0 0
    %216 = vmatprep.subr.bf16.mxu0 0
    %217 = vmatpush1.bf16.msra.mxu0 0
    %218 = vmatprep.subr.bf16.mxu0 0
    %219 = vmatpush1.bf16.msra.mxu0 0
    %220 = vmatprep.subr.bf16.mxu0 0
    %221 = vmatpush1.bf16.msra.mxu0 0
    %222 = vmatprep.subr.bf16.mxu0 0
    %223 = vmatpush1.bf16.msra.mxu0 0
    %224 = vmatprep.subr.bf16.mxu0 0
    %225 = vmatpush1.bf16.msra.mxu0 0
    %226 = vmatprep.subr.bf16.mxu0 0
    %227 = vmatpush1.bf16.msra.mxu0 0
    %228 = vmatprep.mubr.bf16.mxu0 0
    %229 = vmatmul.mubr.bf16.gmra.mrb[0].mxu0 %v124
    %v230 = vpop.f32.mrb[0].mxu0
    %v231 = vadd.f32 %v146, %v230
    %v232 = vpop.f32.mrb[0].mxu0
    %v233 = vpop.f32.mrb[0].mxu0
    %v234 = vpop.f32.mrb[0].mxu0
    %235 = vdwg.mxu0
    %236 = vmax.xlane.f32.xlu0 %v231
    %v237 = vpop.xlane.xlu0 %236
    %v238 = vsub.f32 %v231, %v237
    %v239 = vmul.f32 %v238, 1.442695
    %v240 = vpow.pop %v239
    %241 = vadd.xlane.f32.xlu0 %v240
    %v242 = vpop.xlane.xlu0 %241
    %v243 = vrcp.pop %v242
    %v244 = vmul.f32 %v240, %v243
    %245 = vst [vmem:[#allocation5] sm:$0xff] %v244
    // Predicated region
    $region26: #{tpu_custom_call.1} parent=1 // pred_check
      _
    $region27: #{tpu_custom_call.1} parent=1 // pred_check_branch
      %247 = sbr.rel (0) target = $region29
    $region28: #{tpu_custom_call.1} parent=1 // pred_region
      %s249 = ssub.s32 128, 128
      %250 = vsyncadd [#allocation4], %s249
      %s252 = sshll.u32 [#allocation5], 4
      %s253 = int_to_ptr.vmem [resolvable:$true] %s252
      %255 = dma.vmem_to_hbm [thread:$0]  %s253, 128, %s5, [#allocation4]
    $region29: #{tpu_custom_call.1} parent=1 // pred_fallthru
      _
    // Predicated region
    $region30: #{tpu_custom_call.1} parent=1 // pred_check
      _
    $region31: #{tpu_custom_call.1} parent=1 // pred_check_branch
      %257 = sbr.rel (0) target = $region33
    $region32: #{tpu_custom_call.1} parent=1 // pred_region
      %258 = dma.done [#allocation4], 128
    $region33: #{tpu_custom_call.1} parent=1 // pred_fallthru
      _
    %259 = vsyncpa [#allocation3], 1
    %260 = vsyncpa [#allocation4], 1

</llo_original>
